<compile_context>
chip_gen: v7x
topology: tpu7x:2x2x1
jax: 0.10.0
libtpu: 0.0.40
codegen_flags: <defaults>
</compile_context>

<pallas_src>
import functools

import jax
import jax.numpy as jnp
from jax.experimental import pallas as pl
from jax.experimental.pallas import tpu as pltpu

_LANE = 128        # lane (last-dim) granularity
_SUBLANE_BF16 = 16 # sublane granularity for bf16 batch tiles (covers f32's 8)
_VMEM_BUDGET = 48 << 20   # conservative per-core working-set budget (v7x-safe)
_VMEM_LIMIT_CAP = 64 << 20


def _round_up(n, m):
    return ((n + m - 1) // m) * m


def _resident_spec(shape):
    """Full-array block, constant index_map -> DMA'd once, VMEM-resident.

    Single-buffered (pl.Buffered(1)): the block index never changes, so the
    second pipeline buffer would be pure wasted VMEM.  Falls back to the
    default pipeline on JAX versions without pipeline_mode.
    """
    index_map = lambda i: (0,) * len(shape)
    try:
        return pl.BlockSpec(shape, index_map, pipeline_mode=pl.Buffered(1))
    except Exception:  # pragma: no cover - older JAX without pipeline_mode
        return pl.BlockSpec(shape, index_map)


def _mlp_kernel(num_hidden, valid_out, *refs):
    """refs = (x_ref, w0, b0, w1, b1, ..., w_out, b_out, out_ref).

    x_ref:   (TB, in_p)      bf16  batch tile (pipelined over the grid)
    w_i:     (in_p, out_p)   bf16  pre-transposed, zero-padded, VMEM-resident
    b_i:     (1, out_p)      f32
    out_ref: (TB, out_p)     f32   lane-dense padded output (sliced outside)
    """
    x_ref = refs[0]
    out_ref = refs[-1]
    param_refs = refs[1:-1]

    # x already streamed as bf16; MXU operands bf16, accumulation f32.
    h = x_ref[...]

    # Hidden layers: ReLU(h @ W + b).  Dropout == identity (eval mode).
    # Bias broadcast (1, out) -> (TB, out) is implicit in the add.
    for i in range(num_hidden):
        w = param_refs[2 * i][...]
        b = param_refs[2 * i + 1][...]
        z = jnp.dot(h, w, preferred_element_type=jnp.float32) + b
        h = jnp.maximum(z, 0.0).astype(jnp.bfloat16)  # ReLU in f32, bf16 into next MXU

    # Output layer.
    w_out = param_refs[2 * num_hidden][...]
    b_out = param_refs[2 * num_hidden + 1][...]
    logits = jnp.dot(h, w_out, preferred_element_type=jnp.float32) + b_out

    # Mask padded output lanes so they don't pollute the log_softmax.
    out_p = logits.shape[-1]
    if valid_out < out_p:
        lane = jax.lax.broadcasted_iota(jnp.int32, logits.shape, 1)
        logits = jnp.where(lane < valid_out, logits, jnp.float32(-1e30))

    # Numerically stable log_softmax over dim=1 (feature / lane axis), in f32.
    m = jnp.max(logits, axis=1, keepdims=True)
    shifted = logits - m
    lse = jnp.log(jnp.sum(jnp.exp(shifted), axis=1, keepdims=True))
    out_ref[...] = (shifted - lse).astype(out_ref.dtype)


def init_params(key, input_units, output_units, hidden_units):
    """Deterministic init matching nn.Linear shapes (weight: (out,in), bias: (out,))."""
    sizes = [input_units] + list(hidden_units) + [output_units]
    params = []
    for fan_in, fan_out in zip(sizes[:-1], sizes[1:]):
        key, kw, kb = jax.random.split(key, 3)
        bound = 1.0 / jnp.sqrt(jnp.float32(fan_in))
        w = jax.random.uniform(kw, (fan_out, fan_in), jnp.float32, -bound, bound)
        b = jax.random.uniform(kb, (fan_out,), jnp.float32, -bound, bound)
        params.append((w, b))
    return params


def prepare_params(params):
    """One-time preprocessing (hoisted off the hot path).

    For each nn.Linear-style (W(out,in), b(out,)): transpose W to (in, out),
    zero-pad both feature dims to multiples of 128, cast W to bf16; zero-pad
    b to (1, out_p) in f32.  Returns a list of (w_t, b_p).
    """
    prepared = []
    prev_p = _round_up(params[0][0].shape[1], _LANE)
    for w, b in params:
        fan_out, fan_in = w.shape
        out_pl = _round_up(fan_out, _LANE)
        w_t = jnp.zeros((prev_p, out_pl), jnp.float32)
        w_t = w_t.at[:fan_in, :fan_out].set(jnp.asarray(w, jnp.float32).T)
        w_t = w_t.astype(jnp.bfloat16)
        b_p = jnp.zeros((1, out_pl), jnp.float32)
        b_p = b_p.at[0, :fan_out].set(jnp.asarray(b, jnp.float32))
        prepared.append((w_t, b_p))
        prev_p = out_pl
    return prepared


def network_forward(x, prepared, *, output_units, block_batch=512):
    """x: (batch, input_units) f32.  prepared: output of prepare_params()."""
    num_hidden = len(prepared) - 1
    batch, input_units = x.shape
    in_p = prepared[0][0].shape[0]
    out_p = prepared[-1][0].shape[1]
    max_feat_p = max(w.shape[1] for w, _ in prepared)

    # Resident (single-buffered) weight/bias bytes.
    resident_bytes = sum(w.size * 2 + b.size * 4 for w, b in prepared)

    # ---- batch tile: minimize padded slack, bf16 sublane multiple of 16,
    #      then cap so the steady-state working set fits a v7x-safe budget.
    num_tiles_target = max(1, -(-batch // block_batch))
    tb = _round_up(-(-batch // num_tiles_target), _SUBLANE_BF16)
    per_row = (2 * in_p * 2          # double-buffered bf16 x tiles
               + 2 * out_p * 4       # double-buffered f32 out tiles
               + 2 * max_feat_p * 4) # inter-layer activation temporaries (rough)
    avail = _VMEM_BUDGET - resident_bytes
    if avail > 0:
        max_tb = max(_SUBLANE_BF16, (avail // per_row) // _SUBLANE_BF16 * _SUBLANE_BF16)
        tb = min(tb, max_tb)
    # else: weights alone blow the budget -> needs the weight-streaming TODO.
    padded_batch = _round_up(batch, tb)
    num_tiles = padded_batch // tb

    # ---- x: cast to bf16 once, pad only when needed (no extra copy when aligned).
    x_b = jnp.asarray(x, jnp.float32).astype(jnp.bfloat16)
    pad_b, pad_f = padded_batch - batch, in_p - input_units
    if pad_b or pad_f:
        x_b = jnp.pad(x_b, ((0, pad_b), (0, pad_f)))

    # ---- specs / args.
    flat_args = [x_b]
    in_specs = [pl.BlockSpec((tb, in_p), lambda i: (i, 0))]
    flops = 0
    bytes_accessed = x_b.size * 2
    for w_t, b_p in prepared:
        flat_args += [w_t, b_p]
        in_specs += [_resident_spec(w_t.shape), _resident_spec(b_p.shape)]
        flops += 2 * padded_batch * w_t.shape[0] * w_t.shape[1]
        bytes_accessed += w_t.size * 2 + b_p.size * 4
    bytes_accessed += padded_batch * out_p * 4

    # ---- explicit scoped-VMEM limit (defaults are 16/32 MiB): resident params
    # + double-buffered x/out tiles + activation temporaries, +25% headroom,
    # clamped to 64 MiB so it is valid on every chip generation.
    vmem_need = int(1.25 * (resident_bytes + tb * per_row))
    vmem_limit = min(max(vmem_need, 4 << 20), _VMEM_LIMIT_CAP)

    kernel = functools.partial(_mlp_kernel, num_hidden, output_units)

    out_padded = pl.pallas_call(
        kernel,
        out_shape=jax.ShapeDtypeStruct((padded_batch, out_p), jnp.float32),
        grid=(num_tiles,),
        in_specs=in_specs,
        out_specs=pl.BlockSpec((tb, out_p), lambda i: (i, 0)),
        compiler_params=pltpu.CompilerParams(
            dimension_semantics=("parallel",),  # 2 TCs on v7x; no-op on v5e/v6e
            vmem_limit_bytes=vmem_limit),
        cost_estimate=pl.CostEstimate(
            flops=flops,
            transcendentals=padded_batch * out_p,
            bytes_accessed=bytes_accessed),
    )(*flat_args)

    return out_padded[:batch, :output_units]


def _reference_forward_f32(x, params):
    h = x
    for w, b in params[:-1]:
        h = jnp.maximum(h @ w.T + b, 0.0)
    w, b = params[-1]
    logits = h @ w.T + b
    return jax.nn.log_softmax(logits, axis=1)


def _reference_forward_bf16(x, params):
    # Emulates the kernel's precision: bf16 matmul operands, f32 accumulation,
    # f32 elementwise / log_softmax.
    h = jnp.asarray(x, jnp.float32).astype(jnp.bfloat16)
    for w, b in params[:-1]:
        z = jnp.dot(h, w.T.astype(jnp.bfloat16),
                    preferred_element_type=jnp.float32) + b
        h = jnp.maximum(z, 0.0).astype(jnp.bfloat16)
    w, b = params[-1]
    logits = jnp.dot(h, w.T.astype(jnp.bfloat16),
                     preferred_element_type=jnp.float32) + b
    return jax.nn.log_softmax(logits, axis=1)


if __name__ == "__main__":
    key = jax.random.PRNGKey(0)
    kx, kp = jax.random.split(key)

    # Small shapes consistent with the module.
    batch = 32
    input_units = 32
    hidden_units = [64, 48]
    output_units = 16

    x = jax.random.normal(kx, (batch, input_units), jnp.float32)
    params = init_params(kp, input_units, output_units, hidden_units)

    # One-time weight preprocessing (off the hot path).
    prepared = prepare_params(params)

    # block_batch=16 just to exercise a multi-step pipelined batch grid at this
    # toy size; the production default (512) gives full-size tiles.
    fwd = jax.jit(functools.partial(network_forward,
                                    output_units=output_units,
                                    block_batch=16))
    out = fwd(x, prepared)
    out = jax.block_until_ready(out)
    assert out.shape == (batch, output_units)

    ref_bf16 = _reference_forward_bf16(x, params)
    ref_f32 = _reference_forward_f32(x, params)
    assert jnp.allclose(out, ref_bf16, atol=5e-3, rtol=5e-3), "mismatch vs bf16 reference"
    assert jnp.allclose(out, ref_f32, atol=5e-2, rtol=5e-2), "mismatch vs f32 reference"

    print("KERNEL_OK")
</pallas_src>

<mosaic_0001>
module attributes {stable_mosaic.version = 11 : i64} {
  func.func @_mlp_kernel(%arg0: i32, %arg1: memref<16x128xbf16, #tpu.memory_space<vmem>>, %arg2: memref<128x128xbf16, #tpu.memory_space<vmem>>, %arg3: memref<1x128xf32, #tpu.memory_space<vmem>>, %arg4: memref<128x128xbf16, #tpu.memory_space<vmem>>, %arg5: memref<1x128xf32, #tpu.memory_space<vmem>>, %arg6: memref<128x128xbf16, #tpu.memory_space<vmem>>, %arg7: memref<1x128xf32, #tpu.memory_space<vmem>>, %arg8: memref<16x128xf32, #tpu.memory_space<vmem>>) attributes {dimension_semantics = [#tpu.dimension_semantics<parallel>], iteration_bounds = array<i64: 2>, scalar_prefetch = 0 : i64, scratch_operands = 0 : i64, tpu.core_type = #tpu.core_type<tc>, window_params = [{transform_indices = @transform_0, window_bounds = array<i64: 16, 128>}, {pipeline_mode = #tpu.pipeline_mode<synchronous>, transform_indices = @transform_1, window_bounds = array<i64: 128, 128>}, {pipeline_mode = #tpu.pipeline_mode<synchronous>, transform_indices = @transform_2, window_bounds = array<i64: 1, 128>}, {pipeline_mode = #tpu.pipeline_mode<synchronous>, transform_indices = @transform_3, window_bounds = array<i64: 128, 128>}, {pipeline_mode = #tpu.pipeline_mode<synchronous>, transform_indices = @transform_4, window_bounds = array<i64: 1, 128>}, {pipeline_mode = #tpu.pipeline_mode<synchronous>, transform_indices = @transform_5, window_bounds = array<i64: 128, 128>}, {pipeline_mode = #tpu.pipeline_mode<synchronous>, transform_indices = @transform_6, window_bounds = array<i64: 1, 128>}, {transform_indices = @transform_7, window_bounds = array<i64: 16, 128>}]} {
    %c0 = arith.constant 0 : index
    %c0_0 = arith.constant 0 : index
    %0 = vector.load %arg1[%c0, %c0_0] : memref<16x128xbf16, #tpu.memory_space<vmem>>, vector<16x128xbf16>
    %c0_1 = arith.constant 0 : index
    %c0_2 = arith.constant 0 : index
    %1 = vector.load %arg2[%c0_1, %c0_2] : memref<128x128xbf16, #tpu.memory_space<vmem>>, vector<128x128xbf16>
    %c0_3 = arith.constant 0 : index
    %c0_4 = arith.constant 0 : index
    %2 = vector.load %arg3[%c0_3, %c0_4] : memref<1x128xf32, #tpu.memory_space<vmem>>, vector<1x128xf32>
    %cst = arith.constant dense<0.000000e+00> : vector<16x128xf32>
    %3 = tpu.matmul %0, %1, %cst {dimension_numbers = #tpu.dot_dimension_numbers<[1], [0], [0], [1], [0, 0, 1, 1], [], []>} : vector<16x128xbf16>, vector<128x128xbf16>, vector<16x128xf32> -> vector<16x128xf32>
    %4 = vector.broadcast %2 : vector<1x128xf32> to vector<16x128xf32>
    %5 = arith.addf %3, %4 : vector<16x128xf32>
    %cst_5 = arith.constant 0.000000e+00 : f32
    %6 = vector.broadcast %cst_5 : f32 to vector<16x128xf32>
    %7 = arith.maximumf %5, %6 : vector<16x128xf32>
    %8 = arith.truncf %7 : vector<16x128xf32> to vector<16x128xbf16>
    %c0_6 = arith.constant 0 : index
    %c0_7 = arith.constant 0 : index
    %9 = vector.load %arg4[%c0_6, %c0_7] : memref<128x128xbf16, #tpu.memory_space<vmem>>, vector<128x128xbf16>
    %c0_8 = arith.constant 0 : index
    %c0_9 = arith.constant 0 : index
    %10 = vector.load %arg5[%c0_8, %c0_9] : memref<1x128xf32, #tpu.memory_space<vmem>>, vector<1x128xf32>
    %cst_10 = arith.constant dense<0.000000e+00> : vector<16x128xf32>
    %11 = tpu.matmul %8, %9, %cst_10 {dimension_numbers = #tpu.dot_dimension_numbers<[1], [0], [0], [1], [0, 0, 1, 1], [], []>} : vector<16x128xbf16>, vector<128x128xbf16>, vector<16x128xf32> -> vector<16x128xf32>
    %12 = vector.broadcast %10 : vector<1x128xf32> to vector<16x128xf32>
    %13 = arith.addf %11, %12 : vector<16x128xf32>
    %cst_11 = arith.constant 0.000000e+00 : f32
    %14 = vector.broadcast %cst_11 : f32 to vector<16x128xf32>
    %15 = arith.maximumf %13, %14 : vector<16x128xf32>
    %16 = arith.truncf %15 : vector<16x128xf32> to vector<16x128xbf16>
    %c0_12 = arith.constant 0 : index
    %c0_13 = arith.constant 0 : index
    %17 = vector.load %arg6[%c0_12, %c0_13] : memref<128x128xbf16, #tpu.memory_space<vmem>>, vector<128x128xbf16>
    %c0_14 = arith.constant 0 : index
    %c0_15 = arith.constant 0 : index
    %18 = vector.load %arg7[%c0_14, %c0_15] : memref<1x128xf32, #tpu.memory_space<vmem>>, vector<1x128xf32>
    %cst_16 = arith.constant dense<0.000000e+00> : vector<16x128xf32>
    %19 = tpu.matmul %16, %17, %cst_16 {dimension_numbers = #tpu.dot_dimension_numbers<[1], [0], [0], [1], [0, 0, 1, 1], [], []>} : vector<16x128xbf16>, vector<128x128xbf16>, vector<16x128xf32> -> vector<16x128xf32>
    %20 = vector.broadcast %18 : vector<1x128xf32> to vector<16x128xf32>
    %21 = arith.addf %19, %20 : vector<16x128xf32>
    %22 = tpu.iota {dimensions = array<i32: 1>} : vector<16x128xi32>
    %c16_i32 = arith.constant 16 : i32
    %23 = vector.broadcast %c16_i32 : i32 to vector<16x128xi32>
    %24 = arith.cmpi slt, %22, %23 : vector<16x128xi32>
    %cst_17 = arith.constant -1.000000e+30 : f32
    %25 = vector.broadcast %cst_17 : f32 to vector<16x128xf32>
    %26 = arith.select %24, %21, %25 : vector<16x128xi1>, vector<16x128xf32>
    %cst_18 = arith.constant dense<0xFF800000> : vector<16xf32>
    %27 = vector.multi_reduction <maximumf>, %26, %cst_18 [1] : vector<16x128xf32> to vector<16xf32>
    %28 = vector.shape_cast %27 : vector<16xf32> to vector<16x1xf32>
    %29 = vector.broadcast %28 : vector<16x1xf32> to vector<16x128xf32>
    %30 = arith.subf %26, %29 : vector<16x128xf32>
    %31 = math.exp %30 : vector<16x128xf32>
    %cst_19 = arith.constant dense<0.000000e+00> : vector<16xf32>
    %32 = vector.multi_reduction <add>, %31, %cst_19 [1] : vector<16x128xf32> to vector<16xf32>
    %33 = vector.shape_cast %32 : vector<16xf32> to vector<16x1xf32>
    %34 = math.log %33 : vector<16x1xf32>
    %35 = vector.broadcast %34 : vector<16x1xf32> to vector<16x128xf32>
    %36 = arith.subf %30, %35 : vector<16x128xf32>
    %c0_20 = arith.constant 0 : index
    %c0_21 = arith.constant 0 : index
    %37 = vector.load %arg8[%c0_20, %c0_21] : memref<16x128xf32, #tpu.memory_space<vmem>>, vector<16x128xf32>
    tpu.vector_store %arg8[%c0_20, %c0_21], %36 {strides = array<i32>} : memref<16x128xf32, #tpu.memory_space<vmem>>, vector<16x128xf32>,
    return
  }
  func.func @transform_0(%arg0: i32) -> (i32, i32) {
    %c0_i32 = arith.constant 0 : i32
    %c0_i32_0 = arith.constant 0 : i32
    return %arg0, %c0_i32 : i32, i32
  }
  func.func @transform_1(%arg0: i32) -> (i32, i32) {
    %c0_i32 = arith.constant 0 : i32
    %c0_i32_0 = arith.constant 0 : i32
    %c0_i32_1 = arith.constant 0 : i32
    return %c0_i32, %c0_i32_0 : i32, i32
  }
  func.func @transform_2(%arg0: i32) -> (i32, i32) {
    %c0_i32 = arith.constant 0 : i32
    %c0_i32_0 = arith.constant 0 : i32
    %c0_i32_1 = arith.constant 0 : i32
    return %c0_i32, %c0_i32_0 : i32, i32
  }
  func.func @transform_3(%arg0: i32) -> (i32, i32) {
    %c0_i32 = arith.constant 0 : i32
    %c0_i32_0 = arith.constant 0 : i32
    %c0_i32_1 = arith.constant 0 : i32
    return %c0_i32, %c0_i32_0 : i32, i32
  }
  func.func @transform_4(%arg0: i32) -> (i32, i32) {
    %c0_i32 = arith.constant 0 : i32
    %c0_i32_0 = arith.constant 0 : i32
    %c0_i32_1 = arith.constant 0 : i32
    return %c0_i32, %c0_i32_0 : i32, i32
  }
  func.func @transform_5(%arg0: i32) -> (i32, i32) {
    %c0_i32 = arith.constant 0 : i32
    %c0_i32_0 = arith.constant 0 : i32
    %c0_i32_1 = arith.constant 0 : i32
    return %c0_i32, %c0_i32_0 : i32, i32
  }
  func.func @transform_6(%arg0: i32) -> (i32, i32) {
    %c0_i32 = arith.constant 0 : i32
    %c0_i32_0 = arith.constant 0 : i32
    %c0_i32_1 = arith.constant 0 : i32
    return %c0_i32, %c0_i32_0 : i32, i32
  }
  func.func @transform_7(%arg0: i32) -> (i32, i32) {
    %c0_i32 = arith.constant 0 : i32
    %c0_i32_0 = arith.constant 0 : i32
    return %arg0, %c0_i32 : i32, i32
  }
}

</mosaic_0001>

<llo_original>
// kernel: network_forward.1
$region0: #{network_forward.1}
  #allocation0 [shape = 'u32[]', space=smem, size = 0x4, offset = 0x4, fixed_abs, tag = 'smem constant byte address 0x4 - core index']
  #allocation1 [shape = 'u32[144,128]{1,0:T(1,128)}', space=vmem, size = 0x12000, scoped, tag = 'internal scratch']
  %s0 = inlined_call_operand.vmem [shape: bf16[32,128], index: 0, kind: input, shape index: {}]
  %s1 = inlined_call_operand.vmem [shape: bf16[128,128], index: 1, kind: input, shape index: {}]
  %s2 = inlined_call_operand.vmem [shape: f32[1,128], index: 2, kind: input, shape index: {}]
  %s3 = inlined_call_operand.hbm [shape: bf16[128,128], index: 3, kind: input, shape index: {}]
  %s4 = inlined_call_operand.vmem [shape: f32[1,128], index: 4, kind: input, shape index: {}]
  %s5 = inlined_call_operand.hbm [shape: bf16[128,128], index: 5, kind: input, shape index: {}]
  %s6 = inlined_call_operand.vmem [shape: f32[1,128], index: 6, kind: input, shape index: {}]
  %s7 = inlined_call_operand.vmem [shape: f32[32,128], index: 7, kind: output, shape index: {}]
  %s8 = sld [smem:[#allocation0]]
  $region69: #{network_forward.1} parent=0
    _
  %s10 = ssub.s32 1, %s8
  %s11 = scalar_select 0, %s10, %s8
  $region1: #{network_forward.1} parent=0
    #allocation2 [shape = 'u8[32768]{0}', space=vmem, size = 0x8000, scoped, tag = 'input window, operand 3, single buffered']
    #allocation3 [shape = 's32[2]{0}', space=sflag, size = 0x8, scoped, tag = 'scoped memory for network_forward.1']
    #allocation4 [shape = 'u8[32768]{0}', space=vmem, size = 0x8000, scoped, tag = 'input window, operand 5, single buffered']
    #allocation5 [shape = 's32[1]{0}', space=sflag, size = 0x4, scoped, tag = 'scoped memory for network_forward.1']
    %12 = vsyncpa [#allocation3], 0
    %13 = vsyncpa [#allocation5], 0
    loop: start=0, step=1, limit=4
    $region2: #{network_forward.1} parent=1 // loop_pre_header
      _
    $region3: #{network_forward.1} parent=1 // loop_header
      %s15 = sphi 0, %s19
      %p16 = scmp.ge.s32.totalorder %s15, 4
      %s25 = sphi 0, %s27
      %s28 = sphi 0, %s25
      %s29 = sphi 0, %s28
      %s45 = sphi 0, %s29
      %s49 = sphi 0, %s49
      %s51 = sphi 0, %s49
      %s52 = sphi 0, %s51
      %s66 = sphi 0, %s52
      %s70 = sphi 0, %s70
      %s72 = sphi 0, %s70
      %s73 = sphi 0, %s72
      %s87 = sphi 0, %s73
      %s91 = sphi 0, %s91
      %s93 = sphi 0, %s91
      %s94 = sphi 0, %s93
      %s108 = sphi 0, %s94
      %s112 = sphi 0, %s112
      %s114 = sphi 0, %s112
      %s115 = sphi 0, %s114
      %s129 = sphi 0, %s115
      %s133 = sphi 0, %s133
      %s135 = sphi 0, %s133
      %s136 = sphi 0, %s135
      %s150 = sphi 0, %s136
      %s154 = sphi 0, %s154
      %s156 = sphi 0, %s154
      %s157 = sphi 0, %s156
      %s171 = sphi 0, %s157
      %s177 = sphi 0, %s179
      %s180 = sphi 0, %s177
      %s181 = sphi 0, %s180
      %s197 = sphi 0, %s181
    $region4: #{network_forward.1} parent=1 // loop_header_branch
      %18 = sbr.rel (%p16) target = $region8
    $region5: #{network_forward.1} parent=1 // loop_body
      %s20 = ssub.s32 %s15, 1
      %s21 = ssub.s32 %s15, 2
      %s22 = sadd.s32 %s15, 1
      %s23 = ssub.s32 %s15, %s22
      %p24 = scmp.eq.s32.totalorder %s23, 0
      %s26 = sadd.s32 %s25, 1
      %s27 = scalar_select %p24, %s25, %s26
      %p30 = pneg %p24
      %p31 = scmp.eq.s32.totalorder %s15, 1
      %p32 = por %p30, %p31
      %p33 = scmp.ne.s32.totalorder %s25, %s28
      %p34 = scmp.eq.s32.totalorder %s15, 0
      %p35 = por %p33, %p34
      %p36 = scmp.ne.s32.totalorder %s25, %s28
      %p37 = scmp.eq.s32.totalorder %s20, 1
      %p38 = por %p36, %p37
      %p39 = scmp.ne.s32.totalorder %s28, %s29
      %p40 = scmp.eq.s32.totalorder %s20, 0
      %p41 = por %p39, %p40
      %p42 = scmp.ne.s32.totalorder %s28, %s29
      %p43 = scmp.eq.s32.totalorder %s21, 1
      %p44 = por %p42, %p43
      %p46 = scmp.ne.s32.totalorder %s29, %s45
      %p47 = scmp.eq.s32.totalorder %s21, 0
      %p48 = por %p46, %p47
      %s50 = sadd.s32 %s49, 1
      %p53 = scmp.eq.s32.totalorder %s15, 1
      %p54 = scmp.ne.s32.totalorder %s49, %s51
      %p55 = scmp.eq.s32.totalorder %s15, 0
      %p56 = por %p54, %p55
      %p57 = scmp.ne.s32.totalorder %s49, %s51
      %p58 = scmp.eq.s32.totalorder %s20, 1
      %p59 = por %p57, %p58
      %p60 = scmp.ne.s32.totalorder %s51, %s52
      %p61 = scmp.eq.s32.totalorder %s20, 0
      %p62 = por %p60, %p61
      %p63 = scmp.ne.s32.totalorder %s51, %s52
      %p64 = scmp.eq.s32.totalorder %s21, 1
      %p65 = por %p63, %p64
      %p67 = scmp.ne.s32.totalorder %s52, %s66
      %p68 = scmp.eq.s32.totalorder %s21, 0
      %p69 = por %p67, %p68
      %s71 = sadd.s32 %s70, 1
      %p74 = scmp.eq.s32.totalorder %s15, 1
      %p75 = scmp.ne.s32.totalorder %s70, %s72
      %p76 = scmp.eq.s32.totalorder %s15, 0
      %p77 = por %p75, %p76
      %p78 = scmp.ne.s32.totalorder %s70, %s72
      %p79 = scmp.eq.s32.totalorder %s20, 1
      %p80 = por %p78, %p79
      %p81 = scmp.ne.s32.totalorder %s72, %s73
      %p82 = scmp.eq.s32.totalorder %s20, 0
      %p83 = por %p81, %p82
      %p84 = scmp.ne.s32.totalorder %s72, %s73
      %p85 = scmp.eq.s32.totalorder %s21, 1
      %p86 = por %p84, %p85
      %p88 = scmp.ne.s32.totalorder %s73, %s87
      %p89 = scmp.eq.s32.totalorder %s21, 0
      %p90 = por %p88, %p89
      %s92 = sadd.s32 %s91, 1
      %p95 = scmp.eq.s32.totalorder %s15, 1
      %p96 = scmp.ne.s32.totalorder %s91, %s93
      %p97 = scmp.eq.s32.totalorder %s15, 0
      %p98 = por %p96, %p97
      %p99 = scmp.ne.s32.totalorder %s91, %s93
      %p100 = scmp.eq.s32.totalorder %s20, 1
      %p101 = por %p99, %p100
      %p102 = scmp.ne.s32.totalorder %s93, %s94
      %p103 = scmp.eq.s32.totalorder %s20, 0
      %p104 = por %p102, %p103
      %p105 = scmp.ne.s32.totalorder %s93, %s94
      %p106 = scmp.eq.s32.totalorder %s21, 1
      %p107 = por %p105, %p106
      %p109 = scmp.ne.s32.totalorder %s94, %s108
      %p110 = scmp.eq.s32.totalorder %s21, 0
      %p111 = por %p109, %p110
      %s113 = sadd.s32 %s112, 1
      %p116 = scmp.eq.s32.totalorder %s15, 1
      %p117 = scmp.ne.s32.totalorder %s112, %s114
      %p118 = scmp.eq.s32.totalorder %s15, 0
      %p119 = por %p117, %p118
      %p120 = scmp.ne.s32.totalorder %s112, %s114
      %p121 = scmp.eq.s32.totalorder %s20, 1
      %p122 = por %p120, %p121
      %p123 = scmp.ne.s32.totalorder %s114, %s115
      %p124 = scmp.eq.s32.totalorder %s20, 0
      %p125 = por %p123, %p124
      %p126 = scmp.ne.s32.totalorder %s114, %s115
      %p127 = scmp.eq.s32.totalorder %s21, 1
      %p128 = por %p126, %p127
      %p130 = scmp.ne.s32.totalorder %s115, %s129
      %p131 = scmp.eq.s32.totalorder %s21, 0
      %p132 = por %p130, %p131
      %s134 = sadd.s32 %s133, 1
      %p137 = scmp.eq.s32.totalorder %s15, 1
      %p138 = scmp.ne.s32.totalorder %s133, %s135
      %p139 = scmp.eq.s32.totalorder %s15, 0
      %p140 = por %p138, %p139
      %p141 = scmp.ne.s32.totalorder %s133, %s135
      %p142 = scmp.eq.s32.totalorder %s20, 1
      %p143 = por %p141, %p142
      %p144 = scmp.ne.s32.totalorder %s135, %s136
      %p145 = scmp.eq.s32.totalorder %s20, 0
      %p146 = por %p144, %p145
      %p147 = scmp.ne.s32.totalorder %s135, %s136
      %p148 = scmp.eq.s32.totalorder %s21, 1
      %p149 = por %p147, %p148
      %p151 = scmp.ne.s32.totalorder %s136, %s150
      %p152 = scmp.eq.s32.totalorder %s21, 0
      %p153 = por %p151, %p152
      %s155 = sadd.s32 %s154, 1
      %p158 = scmp.eq.s32.totalorder %s15, 1
      %p159 = scmp.ne.s32.totalorder %s154, %s156
      %p160 = scmp.eq.s32.totalorder %s15, 0
      %p161 = por %p159, %p160
      %p162 = scmp.ne.s32.totalorder %s154, %s156
      %p163 = scmp.eq.s32.totalorder %s20, 1
      %p164 = por %p162, %p163
      %p165 = scmp.ne.s32.totalorder %s156, %s157
      %p166 = scmp.eq.s32.totalorder %s20, 0
      %p167 = por %p165, %p166
      %p168 = scmp.ne.s32.totalorder %s156, %s157
      %p169 = scmp.eq.s32.totalorder %s21, 1
      %p170 = por %p168, %p169
      %p172 = scmp.ne.s32.totalorder %s157, %s171
      %p173 = scmp.eq.s32.totalorder %s21, 0
      %p174 = por %p172, %p173
      %s175 = ssub.s32 %s15, %s22
      %p176 = scmp.eq.s32.totalorder %s175, 0
      %s178 = sadd.s32 %s177, 1
      %s179 = scalar_select %p176, %s177, %s178
      %p182 = pneg %p176
      %p183 = scmp.eq.s32.totalorder %s15, 1
      %p184 = por %p182, %p183
      %p185 = scmp.ne.s32.totalorder %s177, %s180
      %p186 = scmp.eq.s32.totalorder %s15, 0
      %p187 = por %p185, %p186
      %p188 = scmp.ne.s32.totalorder %s177, %s180
      %p189 = scmp.eq.s32.totalorder %s20, 1
      %p190 = por %p188, %p189
      %p191 = scmp.ne.s32.totalorder %s180, %s181
      %p192 = scmp.eq.s32.totalorder %s20, 0
      %p193 = por %p191, %p192
      %p194 = scmp.ne.s32.totalorder %s180, %s181
      %p195 = scmp.eq.s32.totalorder %s21, 1
      %p196 = por %p194, %p195
      %p198 = scmp.ne.s32.totalorder %s181, %s197
      %p199 = scmp.eq.s32.totalorder %s21, 0
      %p200 = por %p198, %p199
      %p201 = scmp.le.s32.totalorder 1, %s15
      %p202 = scmp.lt.s32.totalorder %s15, 3
      %p203 = pnand %p201, %p202
      %p204 = pneg %p203
      // Predicated region
      $region9: #{network_forward.1} parent=5 // pred_check
        _
      $region10: #{network_forward.1} parent=5 // pred_check_branch
        %206 = sbr.rel (%p203) target = $region12
      $region11: #{network_forward.1} parent=5 // pred_region
        %s207 = ssub.s32 %s15, 1
        // Predicated region
        $region13: #{network_forward.1} parent=11 // pred_check
          %p208 = pneg %p62
        $region14: #{network_forward.1} parent=11 // pred_check_branch
          %210 = sbr.rel (%p208) target = $region16
        $region15: #{network_forward.1} parent=11 // pred_region
          _
        $region16: #{network_forward.1} parent=11 // pred_fallthru
          _
        // Predicated region
        $region17: #{network_forward.1} parent=11 // pred_check
          %p211 = pneg %p83
        $region18: #{network_forward.1} parent=11 // pred_check_branch
          %213 = sbr.rel (%p211) target = $region20
        $region19: #{network_forward.1} parent=11 // pred_region
          _
        $region20: #{network_forward.1} parent=11 // pred_fallthru
          _
        // Predicated region
        $region21: #{network_forward.1} parent=11 // pred_check
          %p214 = pneg %p104
        $region22: #{network_forward.1} parent=11 // pred_check_branch
          %216 = sbr.rel (%p214) target = $region24
        $region23: #{network_forward.1} parent=11 // pred_region
          %s218 = ssub.s32 1024, 1024
          %219 = vsyncadd [#allocation3], %s218
          %s220 = sshll.u32 [#allocation2], 4
          %s221 = int_to_ptr.vmem [resolvable:$true] %s220
          %226 = dma.hbm_to_vmem [thread:$0]  %s3, 1024, %s221, [#allocation3], 64, 64, 4
        $region24: #{network_forward.1} parent=11 // pred_fallthru
          _
        // Predicated region
        $region25: #{network_forward.1} parent=11 // pred_check
          %p227 = pneg %p125
        $region26: #{network_forward.1} parent=11 // pred_check_branch
          %229 = sbr.rel (%p227) target = $region28
        $region27: #{network_forward.1} parent=11 // pred_region
          _
        $region28: #{network_forward.1} parent=11 // pred_fallthru
          _
        // Predicated region
        $region29: #{network_forward.1} parent=11 // pred_check
          %p230 = pneg %p146
        $region30: #{network_forward.1} parent=11 // pred_check_branch
          %232 = sbr.rel (%p230) target = $region32
        $region31: #{network_forward.1} parent=11 // pred_region
          %s234 = ssub.s32 1024, 1024
          %235 = vsyncadd [#allocation5], %s234
          %s236 = sshll.u32 [#allocation4], 4
          %s237 = int_to_ptr.vmem [resolvable:$true] %s236
          %242 = dma.hbm_to_vmem [thread:$0]  %s5, 1024, %s237, [#allocation5], 64, 64, 4
        $region32: #{network_forward.1} parent=11 // pred_fallthru
          _
        // Predicated region
        $region33: #{network_forward.1} parent=11 // pred_check
          %p243 = pneg %p167
        $region34: #{network_forward.1} parent=11 // pred_check_branch
          %245 = sbr.rel (%p243) target = $region36
        $region35: #{network_forward.1} parent=11 // pred_region
          _
        $region36: #{network_forward.1} parent=11 // pred_fallthru
          _
      $region12: #{network_forward.1} parent=5 // pred_fallthru
        _
      %p246 = scmp.lt.s32.totalorder %s15, 2
      // Predicated region
      $region37: #{network_forward.1} parent=5 // pred_check
        %p247 = pneg %p246
      $region38: #{network_forward.1} parent=5 // pred_check_branch
        %249 = sbr.rel (%p247) target = $region40
      $region39: #{network_forward.1} parent=5 // pred_region
        // Predicated region
        $region41: #{network_forward.1} parent=39 // pred_check
          %p250 = pneg %p35
        $region42: #{network_forward.1} parent=39 // pred_check_branch
          %252 = sbr.rel (%p250) target = $region44
        $region43: #{network_forward.1} parent=39 // pred_region
          %s253 = smul.u32 2, %s15
          %p254 = scmp.lt.s32.totalorder %s253, 3
          %s255 = scalar_select %p254, %s253, 3
          %s256 = smul.addr %s255, 4
          %s257 = scalar_lea.vmem %s0, %s256
          %s258 = smul.u32 2, %s15
        $region44: #{network_forward.1} parent=39 // pred_fallthru
          _
      $region40: #{network_forward.1} parent=5 // pred_fallthru
        _
      %p259 = scmp.le.s32.totalorder 1, %s15
      %p260 = scmp.lt.s32.totalorder %s15, 3
      %p261 = pnand %p259, %p260
      %p262 = pneg %p261
      // Predicated region
      $region45: #{network_forward.1} parent=5 // pred_check
        _
      $region46: #{network_forward.1} parent=5 // pred_check_branch
        %264 = sbr.rel (%p261) target = $region48
      $region47: #{network_forward.1} parent=5 // pred_region
        %s265 = ssub.s32 %s15, 1
        // Predicated region
        $region49: #{network_forward.1} parent=47 // pred_check
          %p266 = pneg %p104
        $region50: #{network_forward.1} parent=47 // pred_check_branch
          %268 = sbr.rel (%p266) target = $region52
        $region51: #{network_forward.1} parent=47 // pred_region
          %269 = dma.done [#allocation3], 1024
        $region52: #{network_forward.1} parent=47 // pred_fallthru
          _
        // Predicated region
        $region53: #{network_forward.1} parent=47 // pred_check
          %p270 = pneg %p146
        $region54: #{network_forward.1} parent=47 // pred_check_branch
          %272 = sbr.rel (%p270) target = $region56
        $region55: #{network_forward.1} parent=47 // pred_region
          %273 = dma.done [#allocation5], 1024
        $region56: #{network_forward.1} parent=47 // pred_fallthru
          _
        %s274 = smul.u32 2, %s20
        %p275 = scmp.lt.s32.totalorder %s274, 3
        %s276 = scalar_select %p275, %s274, 3
        %s277 = smul.addr %s276, 4
        %s278 = scalar_lea.vmem %s0, %s277
        %p279 = pneg %p41
        %p280 = pneg %p38
        %p281 = pneg %p62
        %p282 = pneg %p59
        %p283 = pneg %p83
        %p284 = pneg %p80
        %p285 = pneg %p104
        %p286 = pneg %p101
        %p287 = pneg %p125
        %p288 = pneg %p122
        %p289 = pneg %p146
        %p290 = pneg %p143
        %p291 = pneg %p167
        %p292 = pneg %p164
        %p293 = pneg %p193
        %p294 = pneg %p190
        %s295 = smul.u32 2, %s20
        %p296 = scmp.lt.s32.totalorder %s295, 3
        %s297 = scalar_select %p296, %s295, 3
        %s298 = smul.addr %s297, 8
        %s299 = scalar_lea.vmem %s7, %s298
        %s300 = smul.u32 2, %s20
        %p301 = scmp.lt.s32.totalorder %s300, 3
        %s302 = scalar_select %p301, %s300, 3
        %s303 = smul.addr %s302, 4
        %s304 = scalar_lea.vmem %s0, %s303
        %s305 = smul.u32 2, %s20
        %s306 = smul.u32 2, %s20
        %p307 = scmp.lt.s32.totalorder %s306, 3
        %s308 = scalar_select %p307, %s306, 3
        %s309 = smul.addr %s308, 8
        %s310 = scalar_lea.vmem %s7, %s309
        %s311 = smul.u32 2, %s20
        %v313 = vld [vmem:[%s304] sm:$0xf]
        %v314 = vld [vmem:[%s304 + $0x4] sm:$0xf]
        %v315 = vld [vmem:[%s1] sm:$0xf]
        %v316 = vld [vmem:[%s1 + $0x4] sm:$0xf]
        %v317 = vld [vmem:[%s1 + $0x8] sm:$0xf]
        %v318 = vld [vmem:[%s1 + $0xc] sm:$0xf]
        %v319 = vld [vmem:[%s1 + $0x10] sm:$0xf]
        %v320 = vld [vmem:[%s1 + $0x14] sm:$0xf]
        %v321 = vld [vmem:[%s1 + $0x18] sm:$0xf]
        %v322 = vld [vmem:[%s1 + $0x1c] sm:$0xf]
        %v323 = vld [vmem:[%s1 + $0x20] sm:$0xf]
        %v324 = vld [vmem:[%s1 + $0x24] sm:$0xf]
        %v325 = vld [vmem:[%s1 + $0x28] sm:$0xf]
        %v326 = vld [vmem:[%s1 + $0x2c] sm:$0xf]
        %v327 = vld [vmem:[%s1 + $0x30] sm:$0xf]
        %v328 = vld [vmem:[%s1 + $0x34] sm:$0xf]
        %v329 = vld [vmem:[%s1 + $0x38] sm:$0xf]
        %v330 = vld [vmem:[%s1 + $0x3c] sm:$0xf]
        %v331 = vld [vmem:[%s2] sm:$0x1]
        %v333 = vlaneseq
        %v334 = vshrl.u32 %v333, 7
        %v335 = vsub.s32 0, %v334
        %v336 = vrot.slane %v331, %v335
        %v340 = vunpack.c.l.b16 %v313
        %v341 = vunpack.c.l.b16 %v314
        %v342 = vpack.c.b16 %v341, %v340
        %v360 = vunpack.c.l.b16 %v315
        %v361 = vunpack.c.l.b16 %v316
        %v362 = vunpack.c.l.b16 %v317
        %v363 = vunpack.c.l.b16 %v318
        %v364 = vunpack.c.l.b16 %v319
        %v365 = vunpack.c.l.b16 %v320
        %v366 = vunpack.c.l.b16 %v321
        %v367 = vunpack.c.l.b16 %v322
        %v368 = vunpack.c.l.b16 %v323
        %v369 = vunpack.c.l.b16 %v324
        %v370 = vunpack.c.l.b16 %v325
        %v371 = vunpack.c.l.b16 %v326
        %v372 = vunpack.c.l.b16 %v327
        %v373 = vunpack.c.l.b16 %v328
        %v374 = vunpack.c.l.b16 %v329
        %v375 = vunpack.c.l.b16 %v330
        %v376 = vpack.c.b16 %v361, %v360
        %v377 = vpack.c.b16 %v363, %v362
        %v378 = vpack.c.b16 %v365, %v364
        %v379 = vpack.c.b16 %v367, %v366
        %v380 = vpack.c.b16 %v369, %v368
        %v381 = vpack.c.b16 %v371, %v370
        %v382 = vpack.c.b16 %v373, %v372
        %v383 = vpack.c.b16 %v375, %v374
        %392 = vmatprep.subr.bf16.mxu0 0
        %393 = vmatpush1.bf16.msra.mxu0 %v376
        %394 = vmatprep.subr.bf16.mxu0 0
        %395 = vmatpush1.bf16.msra.mxu0 %v377
        %396 = vmatprep.subr.bf16.mxu0 0
        %397 = vmatpush1.bf16.msra.mxu0 %v378
        %398 = vmatprep.subr.bf16.mxu0 0
        %399 = vmatpush1.bf16.msra.mxu0 %v379
        %400 = vmatprep.subr.bf16.mxu0 0
        %401 = vmatpush1.bf16.msra.mxu0 %v380
        %402 = vmatprep.subr.bf16.mxu0 0
        %403 = vmatpush1.bf16.msra.mxu0 %v381
        %404 = vmatprep.subr.bf16.mxu0 0
        %405 = vmatpush1.bf16.msra.mxu0 %v382
        %406 = vmatprep.subr.bf16.mxu0 0
        %407 = vmatpush1.bf16.msra.mxu0 %v383
        %408 = vmatprep.subr.bf16.mxu0 0
        %409 = vmatpush1.bf16.msra.mxu0 0
        %410 = vmatprep.subr.bf16.mxu0 0
        %411 = vmatpush1.bf16.msra.mxu0 0
        %412 = vmatprep.subr.bf16.mxu0 0
        %413 = vmatpush1.bf16.msra.mxu0 0
        %414 = vmatprep.subr.bf16.mxu0 0
        %415 = vmatpush1.bf16.msra.mxu0 0
        %416 = vmatprep.subr.bf16.mxu0 0
        %417 = vmatpush1.bf16.msra.mxu0 0
        %418 = vmatprep.subr.bf16.mxu0 0
        %419 = vmatpush1.bf16.msra.mxu0 0
        %420 = vmatprep.subr.bf16.mxu0 0
        %421 = vmatpush1.bf16.msra.mxu0 0
        %422 = vmatprep.subr.bf16.mxu0 0
        %423 = vmatpush1.bf16.msra.mxu0 0
        %424 = vmatprep.mubr.bf16.mxu0 0
        %425 = vmatmul.mubr.bf16.gmra.mrb[0].mxu0 %v342
        %v426 = vpop.f32.mrb[0].mxu0
        %v427 = vadd.f32 %v336, %v426
        %v428 = vpop.f32.mrb[0].mxu0
        %v429 = vpop.f32.mrb[0].mxu0
        %v430 = vadd.f32 %v336, %v429
        %v431 = vpop.f32.mrb[0].mxu0
        %432 = vdwg.mxu0
        %v433 = vmax.f32 %v427, 0.0
        %v434 = vmax.f32 %v430, 0.0
        %v435 = vpack.c.bf16 %v434, %v433
        %v436 = vld [vmem:[#allocation2] sm:$0xf]
        %v437 = vld [vmem:[#allocation2 + $0x4] sm:$0xf]
        %v438 = vld [vmem:[#allocation2 + $0x8] sm:$0xf]
        %v439 = vld [vmem:[#allocation2 + $0xc] sm:$0xf]
        %v440 = vld [vmem:[#allocation2 + $0x10] sm:$0xf]
        %v441 = vld [vmem:[#allocation2 + $0x14] sm:$0xf]
        %v442 = vld [vmem:[#allocation2 + $0x18] sm:$0xf]
        %v443 = vld [vmem:[#allocation2 + $0x1c] sm:$0xf]
        %v444 = vld [vmem:[#allocation2 + $0x20] sm:$0xf]
        %v445 = vld [vmem:[#allocation2 + $0x24] sm:$0xf]
        %v446 = vld [vmem:[#allocation2 + $0x28] sm:$0xf]
        %v447 = vld [vmem:[#allocation2 + $0x2c] sm:$0xf]
        %v448 = vld [vmem:[#allocation2 + $0x30] sm:$0xf]
        %v449 = vld [vmem:[#allocation2 + $0x34] sm:$0xf]
        %v450 = vld [vmem:[#allocation2 + $0x38] sm:$0xf]
        %v451 = vld [vmem:[#allocation2 + $0x3c] sm:$0xf]
        %v452 = vld [vmem:[%s4] sm:$0x1]
        %v454 = vlaneseq
        %v455 = vshrl.u32 %v454, 7
        %v456 = vsub.s32 0, %v455
        %v457 = vrot.slane %v452, %v456
        %v475 = vunpack.c.l.b16 %v436
        %v476 = vunpack.c.l.b16 %v437
        %v477 = vunpack.c.l.b16 %v438
        %v478 = vunpack.c.l.b16 %v439
        %v479 = vunpack.c.l.b16 %v440
        %v480 = vunpack.c.l.b16 %v441
        %v481 = vunpack.c.l.b16 %v442
        %v482 = vunpack.c.l.b16 %v443
        %v483 = vunpack.c.l.b16 %v444
        %v484 = vunpack.c.l.b16 %v445
        %v485 = vunpack.c.l.b16 %v446
        %v486 = vunpack.c.l.b16 %v447
        %v487 = vunpack.c.l.b16 %v448
        %v488 = vunpack.c.l.b16 %v449
        %v489 = vunpack.c.l.b16 %v450
        %v490 = vunpack.c.l.b16 %v451
        %v491 = vpack.c.b16 %v476, %v475
        %v492 = vpack.c.b16 %v478, %v477
        %v493 = vpack.c.b16 %v480, %v479
        %v494 = vpack.c.b16 %v482, %v481
        %v495 = vpack.c.b16 %v484, %v483
        %v496 = vpack.c.b16 %v486, %v485
        %v497 = vpack.c.b16 %v488, %v487
        %v498 = vpack.c.b16 %v490, %v489
        %507 = vmatprep.subr.bf16.mxu0 0
        %508 = vmatpush1.bf16.msra.mxu0 %v491
        %509 = vmatprep.subr.bf16.mxu0 0
        %510 = vmatpush1.bf16.msra.mxu0 %v492
        %511 = vmatprep.subr.bf16.mxu0 0
        %512 = vmatpush1.bf16.msra.mxu0 %v493
        %513 = vmatprep.subr.bf16.mxu0 0
        %514 = vmatpush1.bf16.msra.mxu0 %v494
        %515 = vmatprep.subr.bf16.mxu0 0
        %516 = vmatpush1.bf16.msra.mxu0 %v495
        %517 = vmatprep.subr.bf16.mxu0 0
        %518 = vmatpush1.bf16.msra.mxu0 %v496
        %519 = vmatprep.subr.bf16.mxu0 0
        %520 = vmatpush1.bf16.msra.mxu0 %v497
        %521 = vmatprep.subr.bf16.mxu0 0
        %522 = vmatpush1.bf16.msra.mxu0 %v498
        %523 = vmatprep.subr.bf16.mxu0 0
        %524 = vmatpush1.bf16.msra.mxu0 0
        %525 = vmatprep.subr.bf16.mxu0 0
        %526 = vmatpush1.bf16.msra.mxu0 0
        %527 = vmatprep.subr.bf16.mxu0 0
        %528 = vmatpush1.bf16.msra.mxu0 0
        %529 = vmatprep.subr.bf16.mxu0 0
        %530 = vmatpush1.bf16.msra.mxu0 0
        %531 = vmatprep.subr.bf16.mxu0 0
        %532 = vmatpush1.bf16.msra.mxu0 0
        %533 = vmatprep.subr.bf16.mxu0 0
        %534 = vmatpush1.bf16.msra.mxu0 0
        %535 = vmatprep.subr.bf16.mxu0 0
        %536 = vmatpush1.bf16.msra.mxu0 0
        %537 = vmatprep.subr.bf16.mxu0 0
        %538 = vmatpush1.bf16.msra.mxu0 0
        %539 = vmatprep.mubr.bf16.mxu0 0
        %540 = vmatmul.mubr.bf16.gmra.mrb[0].mxu0 %v435
        %v541 = vpop.f32.mrb[0].mxu0
        %v542 = vadd.f32 %v457, %v541
        %v543 = vpop.f32.mrb[0].mxu0
        %v544 = vpop.f32.mrb[0].mxu0
        %v545 = vadd.f32 %v457, %v544
        %v546 = vpop.f32.mrb[0].mxu0
        %547 = vdwg.mxu0
        %v548 = vmax.f32 %v542, 0.0
        %v549 = vmax.f32 %v545, 0.0
        %v550 = vpack.c.bf16 %v549, %v548
        %v551 = vld [vmem:[#allocation4] sm:$0xf]
        %v552 = vld [vmem:[#allocation4 + $0x4] sm:$0xf]
        %v553 = vld [vmem:[#allocation4 + $0x8] sm:$0xf]
        %v554 = vld [vmem:[#allocation4 + $0xc] sm:$0xf]
        %v555 = vld [vmem:[#allocation4 + $0x10] sm:$0xf]
        %v556 = vld [vmem:[#allocation4 + $0x14] sm:$0xf]
        %v557 = vld [vmem:[#allocation4 + $0x18] sm:$0xf]
        %v558 = vld [vmem:[#allocation4 + $0x1c] sm:$0xf]
        %v559 = vld [vmem:[#allocation4 + $0x20] sm:$0xf]
        %v560 = vld [vmem:[#allocation4 + $0x24] sm:$0xf]
        %v561 = vld [vmem:[#allocation4 + $0x28] sm:$0xf]
        %v562 = vld [vmem:[#allocation4 + $0x2c] sm:$0xf]
        %v563 = vld [vmem:[#allocation4 + $0x30] sm:$0xf]
        %v564 = vld [vmem:[#allocation4 + $0x34] sm:$0xf]
        %v565 = vld [vmem:[#allocation4 + $0x38] sm:$0xf]
        %v566 = vld [vmem:[#allocation4 + $0x3c] sm:$0xf]
        %v567 = vld [vmem:[%s6] sm:$0x1]
        %v569 = vlaneseq
        %v570 = vshrl.u32 %v569, 7
        %v571 = vsub.s32 0, %v570
        %v572 = vrot.slane %v567, %v571
        %v590 = vunpack.c.l.b16 %v551
        %v591 = vunpack.c.l.b16 %v552
        %v592 = vunpack.c.l.b16 %v553
        %v593 = vunpack.c.l.b16 %v554
        %v594 = vunpack.c.l.b16 %v555
        %v595 = vunpack.c.l.b16 %v556
        %v596 = vunpack.c.l.b16 %v557
        %v597 = vunpack.c.l.b16 %v558
        %v598 = vunpack.c.l.b16 %v559
        %v599 = vunpack.c.l.b16 %v560
        %v600 = vunpack.c.l.b16 %v561
        %v601 = vunpack.c.l.b16 %v562
        %v602 = vunpack.c.l.b16 %v563
        %v603 = vunpack.c.l.b16 %v564
        %v604 = vunpack.c.l.b16 %v565
        %v605 = vunpack.c.l.b16 %v566
        %v606 = vpack.c.b16 %v591, %v590
        %v607 = vpack.c.b16 %v593, %v592
        %v608 = vpack.c.b16 %v595, %v594
        %v609 = vpack.c.b16 %v597, %v596
        %v610 = vpack.c.b16 %v599, %v598
        %v611 = vpack.c.b16 %v601, %v600
        %v612 = vpack.c.b16 %v603, %v602
        %v613 = vpack.c.b16 %v605, %v604
        %622 = vmatprep.subr.bf16.mxu0 0
        %623 = vmatpush1.bf16.msra.mxu0 %v606
        %624 = vmatprep.subr.bf16.mxu0 0
        %625 = vmatpush1.bf16.msra.mxu0 %v607
        %626 = vmatprep.subr.bf16.mxu0 0
        %627 = vmatpush1.bf16.msra.mxu0 %v608
        %628 = vmatprep.subr.bf16.mxu0 0
        %629 = vmatpush1.bf16.msra.mxu0 %v609
        %630 = vmatprep.subr.bf16.mxu0 0
        %631 = vmatpush1.bf16.msra.mxu0 %v610
        %632 = vmatprep.subr.bf16.mxu0 0
        %633 = vmatpush1.bf16.msra.mxu0 %v611
        %634 = vmatprep.subr.bf16.mxu0 0
        %635 = vmatpush1.bf16.msra.mxu0 %v612
        %636 = vmatprep.subr.bf16.mxu0 0
        %637 = vmatpush1.bf16.msra.mxu0 %v613
        %638 = vmatprep.subr.bf16.mxu0 0
        %639 = vmatpush1.bf16.msra.mxu0 0
        %640 = vmatprep.subr.bf16.mxu0 0
        %641 = vmatpush1.bf16.msra.mxu0 0
        %642 = vmatprep.subr.bf16.mxu0 0
        %643 = vmatpush1.bf16.msra.mxu0 0
        %644 = vmatprep.subr.bf16.mxu0 0
        %645 = vmatpush1.bf16.msra.mxu0 0
        %646 = vmatprep.subr.bf16.mxu0 0
        %647 = vmatpush1.bf16.msra.mxu0 0
        %648 = vmatprep.subr.bf16.mxu0 0
        %649 = vmatpush1.bf16.msra.mxu0 0
        %650 = vmatprep.subr.bf16.mxu0 0
        %651 = vmatpush1.bf16.msra.mxu0 0
        %652 = vmatprep.subr.bf16.mxu0 0
        %653 = vmatpush1.bf16.msra.mxu0 0
        %654 = vmatprep.mubr.bf16.mxu0 0
        %655 = vmatmul.mubr.bf16.gmra.mrb[0].mxu0 %v550
        %v656 = vpop.f32.mrb[0].mxu0
        %v657 = vadd.f32 %v572, %v656
        %v658 = vpop.f32.mrb[0].mxu0
        %v659 = vpop.f32.mrb[0].mxu0
        %v660 = vadd.f32 %v572, %v659
        %v661 = vpop.f32.mrb[0].mxu0
        %662 = vdwg.mxu0
        %v663 = vlaneseq
        %v664 = vand.u32 %v663, 127
        %vm665 = vcmp.lt.s32.totalorder %v664, 16
        %v666 = vsel %vm665, %v657, -1e+30
        %v667 = vsel %vm665, %v660, -1e+30
        %668 = vmax.xlane.f32.xlu0 %v666
        %v669 = vpop.xlane.xlu0 %668
        %670 = vmax.xlane.f32.xlu0 %v667
        %v671 = vpop.xlane.xlu0 %670
        %v672 = vsub.f32 %v666, %v669
        %v673 = vsub.f32 %v667, %v671
        %v674 = vmul.f32 %v672, 1.442695
        %v675 = vpow.pop %v674
        %v676 = vmul.f32 %v673, 1.442695
        %v677 = vpow.pop %v676
        %678 = vadd.xlane.f32.xlu0 %v675
        %v679 = vpop.xlane.xlu0 %678
        %680 = vadd.xlane.f32.xlu0 %v677
        %v681 = vpop.xlane.xlu0 %680
        %v682 = vlog2.pop %v679
        %v683 = vmul.f32 %v682, 0.6931472
        %v684 = vlog2.pop %v681
        %v685 = vmul.f32 %v684, 0.6931472
        %v686 = vsub.f32 %v672, %v683
        %v687 = vsub.f32 %v673, %v685
        %688 = vst [vmem:[%s310] sm:$0xff] %v686
        %689 = vst [vmem:[%s310 + $0x8] sm:$0xff] %v687
        %s690 = smul.u32 2, %s20
        %p691 = scmp.lt.s32.totalorder %s690, 3
        %s692 = scalar_select %p691, %s690, 3
        %s693 = smul.addr %s692, 8
        %s694 = scalar_lea.vmem %s7, %s693
        // Predicated region
        $region57: #{network_forward.1} parent=47 // pred_check
          %p695 = pneg %p190
        $region58: #{network_forward.1} parent=47 // pred_check_branch
          %697 = sbr.rel (%p695) target = $region60
        $region59: #{network_forward.1} parent=47 // pred_region
          %s698 = smul.u32 2, %s20
        $region60: #{network_forward.1} parent=47 // pred_fallthru
          _
      $region48: #{network_forward.1} parent=5 // pred_fallthru
        _
      %p699 = scmp.le.s32.totalorder 2, %s15
      // Predicated region
      $region61: #{network_forward.1} parent=5 // pred_check
        %p700 = pneg %p699
      $region62: #{network_forward.1} parent=5 // pred_check_branch
        %702 = sbr.rel (%p700) target = $region64
      $region63: #{network_forward.1} parent=5 // pred_region
        %s703 = ssub.s32 %s15, 2
        // Predicated region
        $region65: #{network_forward.1} parent=63 // pred_check
          %p704 = pneg %p196
        $region66: #{network_forward.1} parent=63 // pred_check_branch
          %706 = sbr.rel (%p704) target = $region68
        $region67: #{network_forward.1} parent=63 // pred_region
          %s707 = smul.u32 2, %s21
          %p708 = scmp.lt.s32.totalorder %s707, 3
          %s709 = scalar_select %p708, %s707, 3
          %s710 = smul.addr %s709, 8
          %s711 = scalar_lea.vmem %s7, %s710
        $region68: #{network_forward.1} parent=63 // pred_fallthru
          _
      $region64: #{network_forward.1} parent=5 // pred_fallthru
        _
    $region6: #{network_forward.1} parent=1 // loop_footer
      %s19 = sadd.s32 1, %s15
    $region7: #{network_forward.1} parent=1 // loop_footer_branch
      %14 = sbr.rel target = $region3
    $region8: #{network_forward.1} parent=1 // loop_exit
      _
    %712 = vsyncpa [#allocation3], 1
    %s713 = scalar_lea.sflag [#allocation3], 1
    %714 = vsyncpa %s713, 1
    %715 = vsyncpa [#allocation5], 1

</llo_original>
